<compile_context>
chip_gen: v6e
topology: v6e:2x2x1
jax: 0.10.0
libtpu: 0.0.40
codegen_flags: <defaults>
</compile_context>

<pallas_src>
import jax
import jax.numpy as jnp
from jax.experimental import pallas as pl
from jax.experimental.pallas import tpu as pltpu


def _wce_kernel(x_ref, t_ref, wt_ref, loss_ref, m_scr, l_scr, p_scr):
    """Grid = (row_tiles, class_tiles); class axis is the (inner) reduction axis.

    x_ref   : (tn, tc)  logits tile (VMEM)
    t_ref   : (tn, 1)   int32 targets for this row tile (same block across class axis)
    wt_ref  : (tn, 1)   f32 per-sample class weights (gathered in the wrapper)
    loss_ref: (tn, 1)   f32 per-sample weighted NLL (written once, at the last class tile)
    m_scr   : (tn, 1)   running max          (VMEM scratch, carried across class tiles)
    l_scr   : (tn, 1)   running sum of exp   (VMEM scratch)
    p_scr   : (tn, 1)   picked target logit  (VMEM scratch)
    """
    c = pl.program_id(1)

    @pl.when(c == 0)
    def _init():
        m_scr[...] = jnp.full_like(m_scr, -jnp.inf)
        l_scr[...] = jnp.zeros_like(l_scr)
        p_scr[...] = jnp.zeros_like(p_scr)

    x = x_ref[...].astype(jnp.float32)          # (tn, tc)
    t = t_ref[...]                              # (tn, 1) int32
    tc = x.shape[1]

    # global class ids covered by this class tile
    class_ids = c * tc + jax.lax.broadcasted_iota(jnp.int32, x.shape, 1)

    # online (flash-style) log-sum-exp along the class axis
    m_old = m_scr[...]
    m_new = jnp.maximum(m_old, jnp.max(x, axis=1, keepdims=True))
    l_scr[...] = l_scr[...] * jnp.exp(m_old - m_new) + jnp.sum(
        jnp.exp(x - m_new), axis=1, keepdims=True)
    m_scr[...] = m_new

    # the target logit falls in exactly one class tile; accumulate it (exact, no exp)
    p_scr[...] += jnp.sum(jnp.where(class_ids == t, x, 0.0), axis=1, keepdims=True)

    @pl.when(c == pl.num_programs(1) - 1)
    def _finalize():
        lse = jnp.log(l_scr[...]) + m_scr[...]                 # (tn, 1)
        loss_ref[...] = (lse - p_scr[...]) * wt_ref[...]       # weighted per-sample NLL


def _choose_class_tile(C, max_tile=2048):
    """Largest class tile <= max_tile that is a multiple of 128 and divides C; else full C."""
    if C <= max_tile:
        return C
    t = max_tile - (max_tile % 128)
    while t >= 128:
        if C % t == 0:
            return t
        t -= 128
    # TODO(synk): C not divisible by any 128-multiple tile -> fall back to an un-tiled
    # class axis (may exceed VMEM for very large, oddly-sized C).
    return C


def _choose_row_tile(N, tile_c, target_bytes=4 << 20):
    """Largest row tile dividing N with logits block <= ~target_bytes (sublane-aligned)."""
    budget = max(8, target_bytes // (tile_c * 4))
    if N <= budget:
        return N
    t = budget - (budget % 8)
    while t >= 8:                      # prefer multiples of 8 (f32 sublane tiling)
        if N % t == 0:
            return t
        t -= 8
    return N                           # fallback: full N (always layout-legal)


def weighted_cross_entropy_loss(inputs, targets, weight=None, *, reduction="mean",
                                tile_n=None, tile_c=None):
    """Pallas TPU WeightedCrossEntropyLoss forward.

    inputs : (N, C) float logits
    targets: (N,)   int class indices in [0, C)
    weight : (C,)   optional per-class weights
    """
    N, C = inputs.shape
    targets = targets.astype(jnp.int32)

    # Gather per-sample weights in the wrapper: N*4 bytes of DMA replaces a full
    # (tn, C) masked reduction per grid step inside the kernel.
    if weight is None:
        w_t = jnp.ones((N, 1), jnp.float32)
    else:
        w_t = weight.astype(jnp.float32)[targets].reshape(N, 1)
    t2 = targets.reshape(N, 1)

    if tile_c is None:
        tile_c = _choose_class_tile(C)
    assert C % tile_c == 0, "C must be divisible by the class tile size"
    if tile_n is None:
        tile_n = _choose_row_tile(N, tile_c)
    assert N % tile_n == 0, "N must be divisible by the row tile size"

    grid = (N // tile_n, C // tile_c)

    losses = pl.pallas_call(
        _wce_kernel,
        out_shape=jax.ShapeDtypeStruct((N, 1), jnp.float32),
        grid_spec=pltpu.PrefetchScalarGridSpec(
            num_scalar_prefetch=0,
            grid=grid,
            in_specs=[
                pl.BlockSpec((tile_n, tile_c), lambda r, c: (r, c)),  # logits tile
                pl.BlockSpec((tile_n, 1), lambda r, c: (r, 0)),       # targets
                pl.BlockSpec((tile_n, 1), lambda r, c: (r, 0)),       # per-sample weights
            ],
            out_specs=pl.BlockSpec((tile_n, 1), lambda r, c: (r, 0)), # per-sample losses
            scratch_shapes=[pltpu.VMEM((tile_n, 1), jnp.float32)] * 3,  # m, l, picked
        ),
        compiler_params=pltpu.CompilerParams(
            # row axis independent -> shardable across v7x's 2 TCs; class axis is the
            # serial reduction carried in VMEM scratch.
            dimension_semantics=("parallel", "arbitrary"),
            # ~4 MiB logits block double-buffered (~8 MiB) + tiny side blocks: raise the
            # v5e 16 MiB default while staying well under v7x's 64 MiB physical VMEM.
            vmem_limit_bytes=32 * 1024 * 1024,
        ),
    )(inputs, t2, w_t)

    if reduction == "none":
        return losses[:, 0]
    if reduction == "sum":
        return jnp.sum(losses)
    if reduction == "mean":
        return jnp.mean(losses)   # plain mean over N, matching torch.mean in the module
    raise ValueError(f"Invalid reduction type: {reduction}")


def _reference(inputs, targets, weight):
    x = inputs.astype(jnp.float32)
    logp = jax.nn.log_softmax(x, axis=1)
    nll = -jnp.take_along_axis(logp, targets[:, None].astype(jnp.int32), axis=1)[:, 0]
    if weight is not None:
        nll = nll * weight[targets]
    return jnp.mean(nll)


if __name__ == "__main__":
    key = jax.random.PRNGKey(0)
    N, C = 8, 32
    k1, k2 = jax.random.split(key)
    logits = jax.random.normal(k1, (N, C), jnp.float32)
    targets = jax.random.randint(k2, (N,), 0, C, jnp.int32)
    class_weight = jnp.linspace(0.5, 1.5, C, dtype=jnp.float32)  # deterministic weights

    loss = weighted_cross_entropy_loss(logits, targets, class_weight)
    loss = jax.block_until_ready(loss)

    ref = _reference(logits, targets, class_weight)
    assert jnp.allclose(loss, ref, atol=1e-5, rtol=1e-5), (loss, ref)

    # also sanity-check the no-weight path
    loss_nw = jax.block_until_ready(weighted_cross_entropy_loss(logits, targets, None))
    ref_nw = _reference(logits, targets, None)
    assert jnp.allclose(loss_nw, ref_nw, atol=1e-5, rtol=1e-5), (loss_nw, ref_nw)

    print("KERNEL_OK")
</pallas_src>

<mosaic_0001>
module attributes {stable_mosaic.version = 11 : i64} {
  func.func @_wce_kernel(%arg0: i32, %arg1: i32, %arg2: memref<8x32xf32, #tpu.memory_space<vmem>>, %arg3: memref<8x1xi32, #tpu.memory_space<vmem>>, %arg4: memref<8x1xf32, #tpu.memory_space<vmem>>, %arg5: memref<8x1xf32, #tpu.memory_space<vmem>>, %arg6: memref<8x1xf32, #tpu.memory_space<vmem>>, %arg7: memref<8x1xf32, #tpu.memory_space<vmem>>, %arg8: memref<8x1xf32, #tpu.memory_space<vmem>>) attributes {dimension_semantics = [#tpu.dimension_semantics<parallel>, #tpu.dimension_semantics<arbitrary>], iteration_bounds = array<i64: 1, 1>, scalar_prefetch = 0 : i64, scratch_operands = 3 : i64, tpu.core_type = #tpu.core_type<tc>, window_params = [{transform_indices = @transform_0, window_bounds = array<i64: 8, 32>}, {transform_indices = @transform_1, window_bounds = array<i64: 8, 1>}, {transform_indices = @transform_2, window_bounds = array<i64: 8, 1>}, {transform_indices = @transform_3, window_bounds = array<i64: 8, 1>}]} {
    %c0_i32 = arith.constant 0 : i32
    %0 = arith.cmpi eq, %arg1, %c0_i32 : i32
    %1 = arith.extui %0 : i1 to i32
    %c0_i32_0 = arith.constant 0 : i32
    %2 = arith.cmpi ne, %1, %c0_i32_0 : i32
    scf.if %2 {
      %cst_21 = arith.constant 0xFF800000 : f32
      %37 = vector.broadcast %cst_21 : f32 to vector<8x1xf32>
      %c0_22 = arith.constant 0 : index
      %c0_23 = arith.constant 0 : index
      %38 = vector.load %arg6[%c0_22, %c0_23] : memref<8x1xf32, #tpu.memory_space<vmem>>, vector<8x1xf32>
      tpu.vector_store %arg6[%c0_22, %c0_23], %37 {strides = array<i32>} : memref<8x1xf32, #tpu.memory_space<vmem>>, vector<8x1xf32>,
      %cst_24 = arith.constant 0.000000e+00 : f32
      %39 = vector.broadcast %cst_24 : f32 to vector<8x1xf32>
      %c0_25 = arith.constant 0 : index
      %c0_26 = arith.constant 0 : index
      %40 = vector.load %arg7[%c0_25, %c0_26] : memref<8x1xf32, #tpu.memory_space<vmem>>, vector<8x1xf32>
      tpu.vector_store %arg7[%c0_25, %c0_26], %39 {strides = array<i32>} : memref<8x1xf32, #tpu.memory_space<vmem>>, vector<8x1xf32>,
      %cst_27 = arith.constant 0.000000e+00 : f32
      %41 = vector.broadcast %cst_27 : f32 to vector<8x1xf32>
      %c0_28 = arith.constant 0 : index
      %c0_29 = arith.constant 0 : index
      %42 = vector.load %arg8[%c0_28, %c0_29] : memref<8x1xf32, #tpu.memory_space<vmem>>, vector<8x1xf32>
      tpu.vector_store %arg8[%c0_28, %c0_29], %41 {strides = array<i32>} : memref<8x1xf32, #tpu.memory_space<vmem>>, vector<8x1xf32>,
    } else {
    }
    %c0 = arith.constant 0 : index
    %c0_1 = arith.constant 0 : index
    %3 = vector.load %arg2[%c0, %c0_1] : memref<8x32xf32, #tpu.memory_space<vmem>>, vector<8x32xf32>
    %c0_2 = arith.constant 0 : index
    %c0_3 = arith.constant 0 : index
    %4 = vector.load %arg3[%c0_2, %c0_3] : memref<8x1xi32, #tpu.memory_space<vmem>>, vector<8x1xi32>
    %c32_i32 = arith.constant 32 : i32
    %5 = arith.muli %arg1, %c32_i32 : i32
    %6 = tpu.iota {dimensions = array<i32: 1>} : vector<8x32xi32>
    %7 = vector.broadcast %5 : i32 to vector<8x32xi32>
    %8 = arith.addi %7, %6 : vector<8x32xi32>
    %c0_4 = arith.constant 0 : index
    %c0_5 = arith.constant 0 : index
    %9 = vector.load %arg6[%c0_4, %c0_5] : memref<8x1xf32, #tpu.memory_space<vmem>>, vector<8x1xf32>
    %cst = arith.constant dense<0xFF800000> : vector<8xf32>
    %10 = vector.multi_reduction <maximumf>, %3, %cst [1] : vector<8x32xf32> to vector<8xf32>
    %11 = vector.shape_cast %10 : vector<8xf32> to vector<8x1xf32>
    %12 = arith.maximumf %9, %11 : vector<8x1xf32>
    %c0_6 = arith.constant 0 : index
    %c0_7 = arith.constant 0 : index
    %13 = vector.load %arg7[%c0_6, %c0_7] : memref<8x1xf32, #tpu.memory_space<vmem>>, vector<8x1xf32>
    %14 = arith.subf %9, %12 : vector<8x1xf32>
    %15 = math.exp %14 : vector<8x1xf32>
    %16 = arith.mulf %13, %15 : vector<8x1xf32>
    %17 = vector.broadcast %12 : vector<8x1xf32> to vector<8x32xf32>
    %18 = arith.subf %3, %17 : vector<8x32xf32>
    %19 = math.exp %18 : vector<8x32xf32>
    %cst_8 = arith.constant dense<0.000000e+00> : vector<8xf32>
    %20 = vector.multi_reduction <add>, %19, %cst_8 [1] : vector<8x32xf32> to vector<8xf32>
    %21 = vector.shape_cast %20 : vector<8xf32> to vector<8x1xf32>
    %22 = arith.addf %16, %21 : vector<8x1xf32>
    %c0_9 = arith.constant 0 : index
    %c0_10 = arith.constant 0 : index
    %23 = vector.load %arg7[%c0_9, %c0_10] : memref<8x1xf32, #tpu.memory_space<vmem>>, vector<8x1xf32>
    tpu.vector_store %arg7[%c0_9, %c0_10], %22 {strides = array<i32>} : memref<8x1xf32, #tpu.memory_space<vmem>>, vector<8x1xf32>,
    %c0_11 = arith.constant 0 : index
    %c0_12 = arith.constant 0 : index
    %24 = vector.load %arg6[%c0_11, %c0_12] : memref<8x1xf32, #tpu.memory_space<vmem>>, vector<8x1xf32>
    tpu.vector_store %arg6[%c0_11, %c0_12], %12 {strides = array<i32>} : memref<8x1xf32, #tpu.memory_space<vmem>>, vector<8x1xf32>,
    %c0_13 = arith.constant 0 : index
    %c0_14 = arith.constant 0 : index
    %25 = vector.load %arg8[%c0_13, %c0_14] : memref<8x1xf32, #tpu.memory_space<vmem>>, vector<8x1xf32>
    %26 = vector.broadcast %4 : vector<8x1xi32> to vector<8x32xi32>
    %27 = arith.cmpi eq, %8, %26 : vector<8x32xi32>
    %cst_15 = arith.constant 0.000000e+00 : f32
    %28 = vector.broadcast %cst_15 : f32 to vector<8x32xf32>
    %29 = arith.select %27, %3, %28 : vector<8x32xi1>, vector<8x32xf32>
    %cst_16 = arith.constant dense<0.000000e+00> : vector<8xf32>
    %30 = vector.multi_reduction <add>, %29, %cst_16 [1] : vector<8x32xf32> to vector<8xf32>
    %31 = vector.shape_cast %30 : vector<8xf32> to vector<8x1xf32>
    %32 = arith.addf %25, %31 : vector<8x1xf32>
    %c0_17 = arith.constant 0 : index
    %c0_18 = arith.constant 0 : index
    %33 = vector.load %arg8[%c0_17, %c0_18] : memref<8x1xf32, #tpu.memory_space<vmem>>, vector<8x1xf32>
    tpu.vector_store %arg8[%c0_17, %c0_18], %32 {strides = array<i32>} : memref<8x1xf32, #tpu.memory_space<vmem>>, vector<8x1xf32>,
    %c0_i32_19 = arith.constant 0 : i32
    %34 = arith.cmpi eq, %arg1, %c0_i32_19 : i32
    %35 = arith.extui %34 : i1 to i32
    %c0_i32_20 = arith.constant 0 : i32
    %36 = arith.cmpi ne, %35, %c0_i32_20 : i32
    scf.if %36 {
      %c0_21 = arith.constant 0 : index
      %c0_22 = arith.constant 0 : index
      %37 = vector.load %arg7[%c0_21, %c0_22] : memref<8x1xf32, #tpu.memory_space<vmem>>, vector<8x1xf32>
      %38 = math.log %37 : vector<8x1xf32>
      %c0_23 = arith.constant 0 : index
      %c0_24 = arith.constant 0 : index
      %39 = vector.load %arg6[%c0_23, %c0_24] : memref<8x1xf32, #tpu.memory_space<vmem>>, vector<8x1xf32>
      %40 = arith.addf %38, %39 : vector<8x1xf32>
      %c0_25 = arith.constant 0 : index
      %c0_26 = arith.constant 0 : index
      %41 = vector.load %arg8[%c0_25, %c0_26] : memref<8x1xf32, #tpu.memory_space<vmem>>, vector<8x1xf32>
      %42 = arith.subf %40, %41 : vector<8x1xf32>
      %c0_27 = arith.constant 0 : index
      %c0_28 = arith.constant 0 : index
      %43 = vector.load %arg4[%c0_27, %c0_28] : memref<8x1xf32, #tpu.memory_space<vmem>>, vector<8x1xf32>
      %44 = arith.mulf %42, %43 : vector<8x1xf32>
      %c0_29 = arith.constant 0 : index
      %c0_30 = arith.constant 0 : index
      %45 = vector.load %arg5[%c0_29, %c0_30] : memref<8x1xf32, #tpu.memory_space<vmem>>, vector<8x1xf32>
      tpu.vector_store %arg5[%c0_29, %c0_30], %44 {strides = array<i32>} : memref<8x1xf32, #tpu.memory_space<vmem>>, vector<8x1xf32>,
    } else {
    }
    return
  }
  func.func @transform_0(%arg0: i32, %arg1: i32) -> (i32, i32) {
    %c0_i32 = arith.constant 0 : i32
    return %arg0, %arg1 : i32, i32
  }
  func.func @transform_1(%arg0: i32, %arg1: i32) -> (i32, i32) {
    %c0_i32 = arith.constant 0 : i32
    %c0_i32_0 = arith.constant 0 : i32
    return %arg0, %c0_i32 : i32, i32
  }
  func.func @transform_2(%arg0: i32, %arg1: i32) -> (i32, i32) {
    %c0_i32 = arith.constant 0 : i32
    %c0_i32_0 = arith.constant 0 : i32
    return %arg0, %c0_i32 : i32, i32
  }
  func.func @transform_3(%arg0: i32, %arg1: i32) -> (i32, i32) {
    %c0_i32 = arith.constant 0 : i32
    %c0_i32_0 = arith.constant 0 : i32
    return %arg0, %c0_i32 : i32, i32
  }
}

</mosaic_0001>

<llo_original>
// kernel: tpu_custom_call.1
$region0: #{tpu_custom_call.1}
  #allocation0 [shape = 'u32[]', space=smem, size = 0x4, offset = 0x4, fixed_abs, tag = 'smem constant byte address 0x4 - core index']
  #allocation1 [shape = 'u32[144,128]{1,0:T(1,128)}', space=vmem, size = 0x12000, scoped, tag = 'internal scratch']
  #allocation2 [shape = 'f32[8,1]{1,0:T(8,128)}', space=vmem, size = 0x1000, scoped, tag = 'scratch operand']
  #allocation3 [shape = 'f32[8,1]{1,0:T(8,128)}', space=vmem, size = 0x1000, scoped, tag = 'scratch operand']
  #allocation4 [shape = 'f32[8,1]{1,0:T(8,128)}', space=vmem, size = 0x1000, scoped, tag = 'scratch operand']
  %s0 = inlined_call_operand.vmem [shape: f32[8,32], index: 0, kind: input, shape index: {}]
  %s1 = inlined_call_operand.vmem [shape: s32[8,1], index: 1, kind: input, shape index: {}]
  %s2 = inlined_call_operand.vmem [shape: f32[8,1], index: 2, kind: input, shape index: {}]
  %s3 = inlined_call_operand.vmem [shape: f32[8,1], index: 3, kind: output, shape index: {}]
  %s4 = sld [smem:[#allocation0]]
  $region30: #{tpu_custom_call.1} parent=0
    _
  %s6 = ssub.s32 1, %s4
  %s7 = scalar_select 0, %s6, %s4
  // Predicated region
  $region2: #{tpu_custom_call.1} parent=0 // pred_check
    _
  $region3: #{tpu_custom_call.1} parent=0 // pred_check_branch
    %9 = sbr.rel (0) target = $region5
  $region4: #{tpu_custom_call.1} parent=0 // pred_region
    _
  $region5: #{tpu_custom_call.1} parent=0 // pred_fallthru
    _
  // Predicated region
  $region6: #{tpu_custom_call.1} parent=0 // pred_check
    _
  $region7: #{tpu_custom_call.1} parent=0 // pred_check_branch
    %11 = sbr.rel (0) target = $region9
  $region8: #{tpu_custom_call.1} parent=0 // pred_region
    _
  $region9: #{tpu_custom_call.1} parent=0 // pred_fallthru
    _
  // Predicated region
  $region10: #{tpu_custom_call.1} parent=0 // pred_check
    _
  $region11: #{tpu_custom_call.1} parent=0 // pred_check_branch
    %13 = sbr.rel (0) target = $region13
  $region12: #{tpu_custom_call.1} parent=0 // pred_region
    _
  $region13: #{tpu_custom_call.1} parent=0 // pred_fallthru
    _
  %p14 = scmp.eq.s32.totalorder 0, 0
  // Predicated region
  $region14: #{tpu_custom_call.1} parent=0 // pred_check
    %p15 = pneg %p14
  $region15: #{tpu_custom_call.1} parent=0 // pred_check_branch
    %17 = sbr.rel (%p15) target = $region17
  $region16: #{tpu_custom_call.1} parent=0 // pred_region
    %vm18 = vcmask 7168
    %19 = vst.msk [vmem:[#allocation2] sm:$0xff] %vm18, -inf
    %20 = vst.msk [vmem:[#allocation3] sm:$0xff] %vm18, 0.0
    %21 = vst.msk [vmem:[#allocation4] sm:$0xff] %vm18, 0.0
  $region17: #{tpu_custom_call.1} parent=0 // pred_fallthru
    _
  %v22 = vld [vmem:[%s0] sm:$0xff]
  %v23 = vld [vmem:[%s1] sm:$0xff]
  %s24 = smul.u32 0, 32
  %v25 = vlaneseq
  %v26 = vand.u32 %v25, 127
  %v27 = vstv %s24
  %v28 = vadd.s32 %v27, %v26
  %v29 = vld [vmem:[#allocation2] sm:$0xff]
  %vm30 = vcmask 261120
  %v31 = vsel %vm30, %v22, -inf
  %32 = vmax.xlane.f32.xlu0 %v31
  %v33 = vpop.xlane.xlu0 %32
  %v34 = vmax.f32 %v29, %v33
  %v35 = vld [vmem:[#allocation3] sm:$0xff]
  %v36 = vsub.f32 %v29, %v34
  %v37 = vmul.f32 %v36, 1.442695
  %v38 = vpow.pop %v37
  %v39 = vmul.f32 %v35, %v38
  %41 = vset.pattern.permute.xlu0 0
  %42 = vperm.xlu0 %41, %v34
  %v43 = vpop.permute.xlu0 %42
  %v45 = vsub.f32 %v22, %v43
  %v46 = vmul.f32 %v45, 1.442695
  %v47 = vpow.pop %v46
  %v48 = vsel %vm30, %v47, 0.0
  %49 = vadd.xlane.f32.xlu0 %v48
  %v50 = vpop.xlane.xlu0 %49
  %v51 = vadd.f32 %v39, %v50
  %vm52 = vcmask 7168
  %53 = vst.msk [vmem:[#allocation3] sm:$0xff] %vm52, %v51
  %54 = vst.msk [vmem:[#allocation2] sm:$0xff] %vm52, %v34
  %v55 = vld [vmem:[#allocation4] sm:$0xff]
  %56 = vset.pattern.permute.xlu0 0
  %57 = vperm.xlu0 %56, %v23
  %v58 = vpop.permute.xlu0 %57
  %vm59 = vcmp.eq.s32.totalorder %v28, %v58
  %v60 = vsel %vm59, %v22, 0.0
  %v61 = vsel %vm30, %v60, 0.0
  %62 = vadd.xlane.f32.xlu0 %v61
  %v63 = vpop.xlane.xlu0 %62
  %v64 = vadd.f32 %v55, %v63
  %65 = vst.msk [vmem:[#allocation4] sm:$0xff] %vm52, %v64
  // Predicated region
  $region18: #{tpu_custom_call.1} parent=0 // pred_check
    %p66 = pneg %p14
  $region19: #{tpu_custom_call.1} parent=0 // pred_check_branch
    %68 = sbr.rel (%p66) target = $region21
  $region20: #{tpu_custom_call.1} parent=0 // pred_region
    %v69 = vld [vmem:[#allocation3] sm:$0xff]
    %v70 = vlog2.pop %v69
    %v71 = vmul.f32 %v70, 0.6931472
    %v72 = vld [vmem:[#allocation2] sm:$0xff]
    %v73 = vadd.f32 %v71, %v72
    %v74 = vld [vmem:[#allocation4] sm:$0xff]
    %v75 = vsub.f32 %v73, %v74
    %v76 = vld [vmem:[%s2] sm:$0xff]
    %v77 = vmul.f32 %v75, %v76
    %78 = vst.msk [vmem:[%s3] sm:$0xff] %vm52, %v77
  $region21: #{tpu_custom_call.1} parent=0 // pred_fallthru
    _
  // Predicated region
  $region22: #{tpu_custom_call.1} parent=0 // pred_check
    _
  $region23: #{tpu_custom_call.1} parent=0 // pred_check_branch
    %80 = sbr.rel (0) target = $region25
  $region24: #{tpu_custom_call.1} parent=0 // pred_region
    _
  $region25: #{tpu_custom_call.1} parent=0 // pred_fallthru
    _
  // Predicated region
  $region26: #{tpu_custom_call.1} parent=0 // pred_check
    _
  $region27: #{tpu_custom_call.1} parent=0 // pred_check_branch
    %82 = sbr.rel (0) target = $region29
  $region28: #{tpu_custom_call.1} parent=0 // pred_region
    _
  $region29: #{tpu_custom_call.1} parent=0 // pred_fallthru
    _

</llo_original>
